<compile_context>
chip_gen: v6e
topology: v6e:2x2x1
jax: 0.10.0
libtpu: 0.0.40
codegen_flags: <defaults>
</compile_context>

<pallas_src>
import functools

import jax
import jax.numpy as jnp
from jax.experimental import pallas as pl
from jax.experimental.pallas import tpu as pltpu

MAX_TILE_B = 4096  # at 4096: x blk 256 KB f32 (x2 bufs), f32 h2 1 MB — tiny on every gen.


def _has_bf16_vpu():
    """v6e / v7x have packed bf16 VALUs; v5e and older do not."""
    try:
        kind = jax.devices()[0].device_kind.lower()
    except Exception:
        return True
    return not any(v in kind for v in ("v2", "v3", "v4", "v5"))


def _pick_tile(B, max_tile=MAX_TILE_B):
    if B < 128:
        return B                          # single exact block; nothing to tile
    half = ((pl.cdiv(B, 2) + 127) // 128) * 128
    return min(max_tile, half)            # keep >=2 grid steps when B allows (v7x megacore)


def mlp_kernel(x_ref, w1_ref, b1_ref, w2_ref, b2_ref, w3_ref, b3_ref,
               w4_ref, b4_ref, o_ref, *, relu_bf16):
    # x_ref: (TILE_B, n_input) f32 native layout; w_i: (fout, fin) bf16; b_i: (fout, 1) f32.
    x_bf = x_ref[...].astype(jnp.bfloat16)

    def relu_to_bf16(h):
        if relu_bf16:
            # ReLU commutes with round-to-bf16 -> numerically identical, but the max
            # runs on packed bf16 vregs (half the VALU work on v6e/v7x).
            return jnp.maximum(h.astype(jnp.bfloat16), 0.0)
        return jnp.maximum(h, 0.0).astype(jnp.bfloat16)    # v5e path: no bf16 VALU

    # Layer 1: contract x's feature dim against w1's input dim -> (32, TILE_B).
    # The MXU contraction performs the logical transpose for free.
    h1 = jax.lax.dot_general(
        w1_ref[...], x_bf, dimension_numbers=(((1,), (1,)), ((), ())),
        preferred_element_type=jnp.float32) + b1_ref[...]
    h1 = relu_to_bf16(h1)                                  # (32, TB) bf16

    h2 = jnp.dot(w2_ref[...], h1, preferred_element_type=jnp.float32) + b2_ref[...]
    h2 = relu_to_bf16(h2)                                  # (64, TB) bf16

    h3 = jnp.dot(w3_ref[...], h2, preferred_element_type=jnp.float32) + b3_ref[...]
    h3 = relu_to_bf16(h3)                                  # (32, TB) bf16

    out = jnp.dot(w4_ref[...], h3, preferred_element_type=jnp.float32) + b4_ref[...]
    o_ref[...] = out.astype(o_ref.dtype)                   # (2, TB) lane-dense store


def three_layer_mlp(x, params, *, max_tile_b=MAX_TILE_B):
    """x: (B, n_input) f32. params: PyTorch-style w_i (out,in) f32, b_i (out,1) f32."""
    B, n_input = x.shape
    tile_b = _pick_tile(B, max_tile_b)
    num_tiles = pl.cdiv(B, tile_b)
    B_pad = num_tiles * tile_b   # output-only padding; the ragged input tail is handled
                                 # by Pallas' partial last block (tail columns are
                                 # per-column independent and sliced off below).

    w1, w2, w3, w4 = (params["w1"].astype(jnp.bfloat16),
                      params["w2"].astype(jnp.bfloat16),
                      params["w3"].astype(jnp.bfloat16),
                      params["w4"].astype(jnp.bfloat16))
    b1, b2, b3, b4 = params["b1"], params["b2"], params["b3"], params["b4"]

    const = lambda a: pl.BlockSpec(a.shape, lambda i: (0, 0))  # VMEM-resident weights

    flops = 2 * B_pad * (n_input * 32 + 32 * 64 + 64 * 32 + 32 * 2)
    bytes_accessed = (n_input * B_pad * 4                                   # x (f32)
                      + (32 * n_input + 64 * 32 + 32 * 64 + 2 * 32) * 2     # bf16 weights
                      + (32 + 64 + 32 + 2) * 4                              # f32 biases
                      + 2 * B_pad * 4)                                      # f32 output

    out_t = pl.pallas_call(
        functools.partial(mlp_kernel, relu_bf16=_has_bf16_vpu()),
        out_shape=jax.ShapeDtypeStruct((2, B_pad), jnp.float32),
        grid_spec=pltpu.PrefetchScalarGridSpec(
            num_scalar_prefetch=0,
            grid=(num_tiles,),
            in_specs=[pl.BlockSpec((tile_b, n_input), lambda i: (i, 0)),
                      const(w1), const(b1), const(w2), const(b2),
                      const(w3), const(b3), const(w4), const(b4)],
            out_specs=pl.BlockSpec((2, tile_b), lambda i: (0, i)),
        ),
        compiler_params=pltpu.CompilerParams(
            dimension_semantics=("parallel",)),
        cost_estimate=pl.CostEstimate(flops=flops, transcendentals=0,
                                      bytes_accessed=bytes_accessed),
    )(x.astype(jnp.float32), w1, b1, w2, b2, w3, b3, w4, b4)

    out = out_t[:, :B].T                     # back to PyTorch (B, 2) layout
    # PyTorch .squeeze(): drop size-1 dims (no-op for B>1, gives (2,) for B==1).
    return jnp.squeeze(out)


def init_params(key, n_input):
    """PyTorch-Linear-style init: W (out,in), b (out,1), uniform(-1/sqrt(fan_in), ...)."""
    # TODO(synk): dropout branch (drop_out_rate is not None) not implemented;
    # this reproduces the drop_out_rate=None forward path.
    dims = [(n_input, 32), (32, 64), (64, 32), (32, 2)]
    params = {}
    for i, (fin, fout) in enumerate(dims, start=1):
        key, kw, kb = jax.random.split(key, 3)
        bound = 1.0 / (fin ** 0.5)
        params[f"w{i}"] = jax.random.uniform(
            kw, (fout, fin), jnp.float32, minval=-bound, maxval=bound)
        params[f"b{i}"] = jax.random.uniform(
            kb, (fout, 1), jnp.float32, minval=-bound, maxval=bound)
    return params


def reference_bf16(x, p):
    """Mirrors the kernel numerics exactly (bf16 matmul inputs, f32 accumulate)."""
    h = x.astype(jnp.bfloat16)
    for i in (1, 2, 3):
        h = jnp.dot(h, p[f"w{i}"].T.astype(jnp.bfloat16),
                    preferred_element_type=jnp.float32) + p[f"b{i}"].T
        h = jnp.maximum(h, 0.0).astype(jnp.bfloat16)
    out = jnp.dot(h, p["w4"].T.astype(jnp.bfloat16),
                  preferred_element_type=jnp.float32) + p["b4"].T
    return jnp.squeeze(out)


def reference_f32(x, p):
    h = x
    for i in (1, 2, 3):
        h = jnp.maximum(h @ p[f"w{i}"].T + p[f"b{i}"].T, 0.0)
    return jnp.squeeze(h @ p["w4"].T + p["b4"].T)


if __name__ == "__main__":
    key = jax.random.PRNGKey(0)
    n_input = 16
    batch = 8

    kx, kp, kx2 = jax.random.split(key, 3)
    x = jax.random.normal(kx, (batch, n_input), jnp.float32)
    params = init_params(kp, n_input)

    # Small-batch case (single exact block, B < 128).
    y = jax.block_until_ready(three_layer_mlp(x, params))
    assert y.shape == (batch, 2), y.shape
    assert jnp.allclose(y, reference_bf16(x, params), atol=1e-4, rtol=1e-4)
    assert jnp.allclose(y, reference_f32(x, params), atol=5e-2, rtol=5e-2)

    # Multi-tile + ragged-tail case (B not a multiple of the tile, no wrapper pad).
    x2 = jax.random.normal(kx2, (600, n_input), jnp.float32)
    y2 = jax.block_until_ready(three_layer_mlp(x2, params))
    assert y2.shape == (600, 2), y2.shape
    assert jnp.allclose(y2, reference_bf16(x2, params), atol=1e-4, rtol=1e-4)
    assert jnp.allclose(y2, reference_f32(x2, params), atol=5e-2, rtol=5e-2)

    print("KERNEL_OK")
</pallas_src>

<mosaic_0001>
module attributes {stable_mosaic.version = 11 : i64} {
  func.func @mlp_kernel(%arg0: i32, %arg1: memref<8x16xf32, #tpu.memory_space<vmem>>, %arg2: memref<32x16xbf16, #tpu.memory_space<vmem>>, %arg3: memref<32x1xf32, #tpu.memory_space<vmem>>, %arg4: memref<64x32xbf16, #tpu.memory_space<vmem>>, %arg5: memref<64x1xf32, #tpu.memory_space<vmem>>, %arg6: memref<32x64xbf16, #tpu.memory_space<vmem>>, %arg7: memref<32x1xf32, #tpu.memory_space<vmem>>, %arg8: memref<2x32xbf16, #tpu.memory_space<vmem>>, %arg9: memref<2x1xf32, #tpu.memory_space<vmem>>, %arg10: memref<2x8xf32, #tpu.memory_space<vmem>>) attributes {dimension_semantics = [#tpu.dimension_semantics<parallel>], iteration_bounds = array<i64: 1>, scalar_prefetch = 0 : i64, scratch_operands = 0 : i64, tpu.core_type = #tpu.core_type<tc>, window_params = [{transform_indices = @transform_0, window_bounds = array<i64: 8, 16>}, {pipeline_mode = #tpu.pipeline_mode<synchronous>, transform_indices = @transform_1, window_bounds = array<i64: 32, 16>}, {pipeline_mode = #tpu.pipeline_mode<synchronous>, transform_indices = @transform_2, window_bounds = array<i64: 32, 1>}, {pipeline_mode = #tpu.pipeline_mode<synchronous>, transform_indices = @transform_3, window_bounds = array<i64: 64, 32>}, {pipeline_mode = #tpu.pipeline_mode<synchronous>, transform_indices = @transform_4, window_bounds = array<i64: 64, 1>}, {pipeline_mode = #tpu.pipeline_mode<synchronous>, transform_indices = @transform_5, window_bounds = array<i64: 32, 64>}, {pipeline_mode = #tpu.pipeline_mode<synchronous>, transform_indices = @transform_6, window_bounds = array<i64: 32, 1>}, {pipeline_mode = #tpu.pipeline_mode<synchronous>, transform_indices = @transform_7, window_bounds = array<i64: 2, 32>}, {pipeline_mode = #tpu.pipeline_mode<synchronous>, transform_indices = @transform_8, window_bounds = array<i64: 2, 1>}, {transform_indices = @transform_9, window_bounds = array<i64: 2, 8>}]} {
    %c0 = arith.constant 0 : index
    %c0_0 = arith.constant 0 : index
    %0 = vector.load %arg1[%c0, %c0_0] : memref<8x16xf32, #tpu.memory_space<vmem>>, vector<8x16xf32>
    %1 = arith.truncf %0 : vector<8x16xf32> to vector<8x16xbf16>
    %c0_1 = arith.constant 0 : index
    %c0_2 = arith.constant 0 : index
    %2 = vector.load %arg2[%c0_1, %c0_2] : memref<32x16xbf16, #tpu.memory_space<vmem>>, vector<32x16xbf16>
    %cst = arith.constant dense<0.000000e+00> : vector<32x8xf32>
    %3 = tpu.matmul %2, %1, %cst {dimension_numbers = #tpu.dot_dimension_numbers<[1], [1], [0], [0], [0, 0, 1, 0], [], []>} : vector<32x16xbf16>, vector<8x16xbf16>, vector<32x8xf32> -> vector<32x8xf32>
    %c0_3 = arith.constant 0 : index
    %c0_4 = arith.constant 0 : index
    %4 = vector.load %arg3[%c0_3, %c0_4] : memref<32x1xf32, #tpu.memory_space<vmem>>, vector<32x1xf32>
    %5 = vector.broadcast %4 : vector<32x1xf32> to vector<32x8xf32>
    %6 = arith.addf %3, %5 : vector<32x8xf32>
    %7 = arith.truncf %6 : vector<32x8xf32> to vector<32x8xbf16>
    %cst_5 = arith.constant 0.000000e+00 : bf16
    %8 = vector.broadcast %cst_5 : bf16 to vector<32x8xbf16>
    %9 = arith.maximumf %7, %8 : vector<32x8xbf16>
    %c0_6 = arith.constant 0 : index
    %c0_7 = arith.constant 0 : index
    %10 = vector.load %arg4[%c0_6, %c0_7] : memref<64x32xbf16, #tpu.memory_space<vmem>>, vector<64x32xbf16>
    %cst_8 = arith.constant dense<0.000000e+00> : vector<64x8xf32>
    %11 = tpu.matmul %10, %9, %cst_8 {dimension_numbers = #tpu.dot_dimension_numbers<[1], [0], [0], [1], [0, 0, 1, 1], [], []>} : vector<64x32xbf16>, vector<32x8xbf16>, vector<64x8xf32> -> vector<64x8xf32>
    %c0_9 = arith.constant 0 : index
    %c0_10 = arith.constant 0 : index
    %12 = vector.load %arg5[%c0_9, %c0_10] : memref<64x1xf32, #tpu.memory_space<vmem>>, vector<64x1xf32>
    %13 = vector.broadcast %12 : vector<64x1xf32> to vector<64x8xf32>
    %14 = arith.addf %11, %13 : vector<64x8xf32>
    %15 = arith.truncf %14 : vector<64x8xf32> to vector<64x8xbf16>
    %cst_11 = arith.constant 0.000000e+00 : bf16
    %16 = vector.broadcast %cst_11 : bf16 to vector<64x8xbf16>
    %17 = arith.maximumf %15, %16 : vector<64x8xbf16>
    %c0_12 = arith.constant 0 : index
    %c0_13 = arith.constant 0 : index
    %18 = vector.load %arg6[%c0_12, %c0_13] : memref<32x64xbf16, #tpu.memory_space<vmem>>, vector<32x64xbf16>
    %cst_14 = arith.constant dense<0.000000e+00> : vector<32x8xf32>
    %19 = tpu.matmul %18, %17, %cst_14 {dimension_numbers = #tpu.dot_dimension_numbers<[1], [0], [0], [1], [0, 0, 1, 1], [], []>} : vector<32x64xbf16>, vector<64x8xbf16>, vector<32x8xf32> -> vector<32x8xf32>
    %c0_15 = arith.constant 0 : index
    %c0_16 = arith.constant 0 : index
    %20 = vector.load %arg7[%c0_15, %c0_16] : memref<32x1xf32, #tpu.memory_space<vmem>>, vector<32x1xf32>
    %21 = vector.broadcast %20 : vector<32x1xf32> to vector<32x8xf32>
    %22 = arith.addf %19, %21 : vector<32x8xf32>
    %23 = arith.truncf %22 : vector<32x8xf32> to vector<32x8xbf16>
    %cst_17 = arith.constant 0.000000e+00 : bf16
    %24 = vector.broadcast %cst_17 : bf16 to vector<32x8xbf16>
    %25 = arith.maximumf %23, %24 : vector<32x8xbf16>
    %c0_18 = arith.constant 0 : index
    %c0_19 = arith.constant 0 : index
    %26 = vector.load %arg8[%c0_18, %c0_19] : memref<2x32xbf16, #tpu.memory_space<vmem>>, vector<2x32xbf16>
    %cst_20 = arith.constant dense<0.000000e+00> : vector<2x8xf32>
    %27 = tpu.matmul %26, %25, %cst_20 {dimension_numbers = #tpu.dot_dimension_numbers<[1], [0], [0], [1], [0, 0, 1, 1], [], []>} : vector<2x32xbf16>, vector<32x8xbf16>, vector<2x8xf32> -> vector<2x8xf32>
    %c0_21 = arith.constant 0 : index
    %c0_22 = arith.constant 0 : index
    %28 = vector.load %arg9[%c0_21, %c0_22] : memref<2x1xf32, #tpu.memory_space<vmem>>, vector<2x1xf32>
    %29 = vector.broadcast %28 : vector<2x1xf32> to vector<2x8xf32>
    %30 = arith.addf %27, %29 : vector<2x8xf32>
    %c0_23 = arith.constant 0 : index
    %c0_24 = arith.constant 0 : index
    %31 = vector.load %arg10[%c0_23, %c0_24] : memref<2x8xf32, #tpu.memory_space<vmem>>, vector<2x8xf32>
    tpu.vector_store %arg10[%c0_23, %c0_24], %30 {strides = array<i32>} : memref<2x8xf32, #tpu.memory_space<vmem>>, vector<2x8xf32>,
    return
  }
  func.func @transform_0(%arg0: i32) -> (i32, i32) {
    %c0_i32 = arith.constant 0 : i32
    %c0_i32_0 = arith.constant 0 : i32
    return %arg0, %c0_i32 : i32, i32
  }
  func.func @transform_1(%arg0: i32) -> (i32, i32) {
    %c0_i32 = arith.constant 0 : i32
    %c0_i32_0 = arith.constant 0 : i32
    %c0_i32_1 = arith.constant 0 : i32
    return %c0_i32, %c0_i32_0 : i32, i32
  }
  func.func @transform_2(%arg0: i32) -> (i32, i32) {
    %c0_i32 = arith.constant 0 : i32
    %c0_i32_0 = arith.constant 0 : i32
    %c0_i32_1 = arith.constant 0 : i32
    return %c0_i32, %c0_i32_0 : i32, i32
  }
  func.func @transform_3(%arg0: i32) -> (i32, i32) {
    %c0_i32 = arith.constant 0 : i32
    %c0_i32_0 = arith.constant 0 : i32
    %c0_i32_1 = arith.constant 0 : i32
    return %c0_i32, %c0_i32_0 : i32, i32
  }
  func.func @transform_4(%arg0: i32) -> (i32, i32) {
    %c0_i32 = arith.constant 0 : i32
    %c0_i32_0 = arith.constant 0 : i32
    %c0_i32_1 = arith.constant 0 : i32
    return %c0_i32, %c0_i32_0 : i32, i32
  }
  func.func @transform_5(%arg0: i32) -> (i32, i32) {
    %c0_i32 = arith.constant 0 : i32
    %c0_i32_0 = arith.constant 0 : i32
    %c0_i32_1 = arith.constant 0 : i32
    return %c0_i32, %c0_i32_0 : i32, i32
  }
  func.func @transform_6(%arg0: i32) -> (i32, i32) {
    %c0_i32 = arith.constant 0 : i32
    %c0_i32_0 = arith.constant 0 : i32
    %c0_i32_1 = arith.constant 0 : i32
    return %c0_i32, %c0_i32_0 : i32, i32
  }
  func.func @transform_7(%arg0: i32) -> (i32, i32) {
    %c0_i32 = arith.constant 0 : i32
    %c0_i32_0 = arith.constant 0 : i32
    %c0_i32_1 = arith.constant 0 : i32
    return %c0_i32, %c0_i32_0 : i32, i32
  }
  func.func @transform_8(%arg0: i32) -> (i32, i32) {
    %c0_i32 = arith.constant 0 : i32
    %c0_i32_0 = arith.constant 0 : i32
    %c0_i32_1 = arith.constant 0 : i32
    return %c0_i32, %c0_i32_0 : i32, i32
  }
  func.func @transform_9(%arg0: i32) -> (i32, i32) {
    %c0_i32 = arith.constant 0 : i32
    %c0_i32_0 = arith.constant 0 : i32
    return %c0_i32, %arg0 : i32, i32
  }
}

</mosaic_0001>

<llo_original>
// kernel: tpu_custom_call.1
$region0: #{tpu_custom_call.1}
  #allocation0 [shape = 'u32[]', space=smem, size = 0x4, offset = 0x4, fixed_abs, tag = 'smem constant byte address 0x4 - core index']
  #allocation1 [shape = 'u32[144,128]{1,0:T(1,128)}', space=vmem, size = 0x12000, scoped, tag = 'internal scratch']
  %s0 = inlined_call_operand.vmem [shape: f32[8,16], index: 0, kind: input, shape index: {}]
  %s1 = inlined_call_operand.vmem [shape: bf16[32,16], index: 1, kind: input, shape index: {}]
  %s2 = inlined_call_operand.vmem [shape: f32[32,1], index: 2, kind: input, shape index: {}]
  %s3 = inlined_call_operand.vmem [shape: bf16[64,32], index: 3, kind: input, shape index: {}]
  %s4 = inlined_call_operand.vmem [shape: f32[64,1], index: 4, kind: input, shape index: {}]
  %s5 = inlined_call_operand.vmem [shape: bf16[32,64], index: 5, kind: input, shape index: {}]
  %s6 = inlined_call_operand.vmem [shape: f32[32,1], index: 6, kind: input, shape index: {}]
  %s7 = inlined_call_operand.vmem [shape: bf16[2,32], index: 7, kind: input, shape index: {}]
  %s8 = inlined_call_operand.vmem [shape: f32[2,1], index: 8, kind: input, shape index: {}]
  %s9 = inlined_call_operand.hbm [shape: f32[2,8], index: 9, kind: output, shape index: {}]
  %s10 = sld [smem:[#allocation0]]
  $region46: #{tpu_custom_call.1} parent=0
    _
  %s12 = ssub.s32 1, %s10
  %s13 = scalar_select 0, %s12, %s10
  $region1: #{tpu_custom_call.1} parent=0
    #allocation2 [shape = 'u8[1024]{0}', space=vmem, size = 0x400, scoped, tag = 'output window, operand 0, single buffered']
    #allocation3 [shape = 's32[1]{0}', space=sflag, size = 0x4, scoped, tag = 'scoped memory for tpu_custom_call.1']
    %14 = vsyncpa [#allocation3], 0
    // Predicated region
    $region2: #{tpu_custom_call.1} parent=1 // pred_check
      _
    $region3: #{tpu_custom_call.1} parent=1 // pred_check_branch
      %16 = sbr.rel (0) target = $region5
    $region4: #{tpu_custom_call.1} parent=1 // pred_region
      _
    $region5: #{tpu_custom_call.1} parent=1 // pred_fallthru
      _
    // Predicated region
    $region6: #{tpu_custom_call.1} parent=1 // pred_check
      _
    $region7: #{tpu_custom_call.1} parent=1 // pred_check_branch
      %18 = sbr.rel (0) target = $region9
    $region8: #{tpu_custom_call.1} parent=1 // pred_region
      _
    $region9: #{tpu_custom_call.1} parent=1 // pred_fallthru
      _
    // Predicated region
    $region10: #{tpu_custom_call.1} parent=1 // pred_check
      _
    $region11: #{tpu_custom_call.1} parent=1 // pred_check_branch
      %20 = sbr.rel (0) target = $region13
    $region12: #{tpu_custom_call.1} parent=1 // pred_region
      _
    $region13: #{tpu_custom_call.1} parent=1 // pred_fallthru
      _
    // Predicated region
    $region14: #{tpu_custom_call.1} parent=1 // pred_check
      _
    $region15: #{tpu_custom_call.1} parent=1 // pred_check_branch
      %22 = sbr.rel (0) target = $region17
    $region16: #{tpu_custom_call.1} parent=1 // pred_region
      _
    $region17: #{tpu_custom_call.1} parent=1 // pred_fallthru
      _
    // Predicated region
    $region18: #{tpu_custom_call.1} parent=1 // pred_check
      _
    $region19: #{tpu_custom_call.1} parent=1 // pred_check_branch
      %24 = sbr.rel (0) target = $region21
    $region20: #{tpu_custom_call.1} parent=1 // pred_region
      _
    $region21: #{tpu_custom_call.1} parent=1 // pred_fallthru
      _
    // Predicated region
    $region22: #{tpu_custom_call.1} parent=1 // pred_check
      _
    $region23: #{tpu_custom_call.1} parent=1 // pred_check_branch
      %26 = sbr.rel (0) target = $region25
    $region24: #{tpu_custom_call.1} parent=1 // pred_region
      _
    $region25: #{tpu_custom_call.1} parent=1 // pred_fallthru
      _
    // Predicated region
    $region26: #{tpu_custom_call.1} parent=1 // pred_check
      _
    $region27: #{tpu_custom_call.1} parent=1 // pred_check_branch
      %28 = sbr.rel (0) target = $region29
    $region28: #{tpu_custom_call.1} parent=1 // pred_region
      _
    $region29: #{tpu_custom_call.1} parent=1 // pred_fallthru
      _
    // Predicated region
    $region30: #{tpu_custom_call.1} parent=1 // pred_check
      _
    $region31: #{tpu_custom_call.1} parent=1 // pred_check_branch
      %30 = sbr.rel (0) target = $region33
    $region32: #{tpu_custom_call.1} parent=1 // pred_region
      _
    $region33: #{tpu_custom_call.1} parent=1 // pred_fallthru
      _
    // Predicated region
    $region34: #{tpu_custom_call.1} parent=1 // pred_check
      _
    $region35: #{tpu_custom_call.1} parent=1 // pred_check_branch
      %32 = sbr.rel (0) target = $region37
    $region36: #{tpu_custom_call.1} parent=1 // pred_region
      _
    $region37: #{tpu_custom_call.1} parent=1 // pred_fallthru
      _
    %v34 = vld [vmem:[%s0] sm:$0xff]
    %v35 = vpack.c.bf16 %v34, %v34
    %v36 = vld [vmem:[%s1] sm:$0xf]
    %v37 = vld [vmem:[%s1 + $0x4] sm:$0xf]
    %v38 = vld [vmem:[%s1 + $0x8] sm:$0xf]
    %v39 = vld [vmem:[%s1 + $0xc] sm:$0xf]
    %v40 = vld [vmem:[%s2] sm:$0xff]
    %v41 = vld [vmem:[%s2 + $0x8] sm:$0xff]
    %v42 = vld [vmem:[%s2 + $0x10] sm:$0xff]
    %v43 = vld [vmem:[%s2 + $0x18] sm:$0xff]
    %45 = vset.pattern.permute.xlu0 0
    %46 = vperm.xlu0 %45, %v40
    %v47 = vpop.permute.xlu0 %46
    %50 = vset.pattern.permute.xlu0 0
    %51 = vperm.xlu0 %50, %v41
    %v52 = vpop.permute.xlu0 %51
    %55 = vset.pattern.permute.xlu0 0
    %56 = vperm.xlu0 %55, %v42
    %v57 = vpop.permute.xlu0 %56
    %60 = vset.pattern.permute.xlu0 0
    %61 = vperm.xlu0 %60, %v43
    %v62 = vpop.permute.xlu0 %61
    %v68 = vunpack.c.l.b16 %v36
    %v69 = vunpack.c.l.b16 %v37
    %v70 = vunpack.c.l.b16 %v38
    %v71 = vunpack.c.l.b16 %v39
    %v72 = vpack.c.b16 %v69, %v68
    %v73 = vpack.c.b16 %v71, %v70
    %vm74 = vcmask 130048
    %v76 = vsel %vm74, %v72, 0
    %v79 = vsel %vm74, %v73, 0
    %v82 = vsel %vm74, %v35, 0
    %84 = vmatprep.subr.bf16.mxu0 0
    %85 = vmatpush1.bf16.xpose.msra.mxu0 0
    %86 = vmatprep.subr.bf16.mxu0 0
    %87 = vmatpush1.bf16.xpose.msra.mxu0 0
    %88 = vmatprep.subr.bf16.mxu0 0
    %89 = vmatpush1.bf16.xpose.msra.mxu0 0
    %90 = vmatprep.subr.bf16.mxu0 0
    %91 = vmatpush1.bf16.xpose.msra.mxu0 0
    %92 = vmatprep.subr.bf16.mxu0 0
    %93 = vmatpush1.bf16.xpose.msra.mxu0 0
    %94 = vmatprep.subr.bf16.mxu0 0
    %95 = vmatpush1.bf16.xpose.msra.mxu0 0
    %96 = vmatprep.subr.bf16.mxu0 0
    %97 = vmatpush1.bf16.xpose.msra.mxu0 0
    %98 = vmatprep.subr.bf16.mxu0 0
    %99 = vmatpush1.bf16.xpose.msra.mxu0 %v82
    %100 = vmatprep.subr.bf16.mxu0 0
    %101 = vmatpush2.bf16.xpose.msra.mxu0 0
    %102 = vmatprep.subr.bf16.mxu0 0
    %103 = vmatpush2.bf16.xpose.msra.mxu0 0
    %104 = vmatprep.subr.bf16.mxu0 0
    %105 = vmatpush2.bf16.xpose.msra.mxu0 0
    %106 = vmatprep.subr.bf16.mxu0 0
    %107 = vmatpush2.bf16.xpose.msra.mxu0 0
    %108 = vmatprep.subr.bf16.mxu0 0
    %109 = vmatpush2.bf16.xpose.msra.mxu0 0
    %110 = vmatprep.subr.bf16.mxu0 0
    %111 = vmatpush2.bf16.xpose.msra.mxu0 0
    %112 = vmatprep.subr.bf16.mxu0 0
    %113 = vmatpush2.bf16.xpose.msra.mxu0 0
    %114 = vmatprep.subr.bf16.mxu0 0
    %115 = vmatpush2.bf16.xpose.msra.mxu0 0
    %116 = vmatprep.mubr.bf16.mxu0 0
    %117 = vmatmul.mubr.bf16.gmra.mxu0 %v76
    %v118 = vpop.f32.mrf.mxu0
    %v119 = vadd.f32 %v47, %v118
    %v120 = vpop.f32.mrf.mxu0
    %v121 = vpop.f32.mrf.mxu0
    %v122 = vadd.f32 %v52, %v121
    %v123 = vpop.f32.mrf.mxu0
    %124 = vmatprep.mubr.bf16.mxu0 0
    %125 = vmatmul.mubr.bf16.gmra.mxu0 %v79
    %v126 = vpop.f32.mrf.mxu0
    %v127 = vadd.f32 %v57, %v126
    %v128 = vpop.f32.mrf.mxu0
    %v129 = vpop.f32.mrf.mxu0
    %v130 = vadd.f32 %v62, %v129
    %v131 = vpop.f32.mrf.mxu0
    %132 = vdwg.mxu0
    %v133 = vpack.c.bf16 %v122, %v119
    %v134 = vpack.c.bf16 %v130, %v127
    %v135 = vmax.bf16 %v133, 0
    %v136 = vmax.bf16 %v134, 0
    %v137 = vld [vmem:[%s3] sm:$0xf]
    %v138 = vld [vmem:[%s3 + $0x4] sm:$0xf]
    %v139 = vld [vmem:[%s3 + $0x8] sm:$0xf]
    %v140 = vld [vmem:[%s3 + $0xc] sm:$0xf]
    %v141 = vld [vmem:[%s3 + $0x10] sm:$0xf]
    %v142 = vld [vmem:[%s3 + $0x14] sm:$0xf]
    %v143 = vld [vmem:[%s3 + $0x18] sm:$0xf]
    %v144 = vld [vmem:[%s3 + $0x1c] sm:$0xf]
    %v145 = vld [vmem:[%s4] sm:$0xff]
    %v146 = vld [vmem:[%s4 + $0x8] sm:$0xff]
    %v147 = vld [vmem:[%s4 + $0x10] sm:$0xff]
    %v148 = vld [vmem:[%s4 + $0x18] sm:$0xff]
    %v149 = vld [vmem:[%s4 + $0x20] sm:$0xff]
    %v150 = vld [vmem:[%s4 + $0x28] sm:$0xff]
    %v151 = vld [vmem:[%s4 + $0x30] sm:$0xff]
    %v152 = vld [vmem:[%s4 + $0x38] sm:$0xff]
    %154 = vset.pattern.permute.xlu0 0
    %155 = vperm.xlu0 %154, %v145
    %v156 = vpop.permute.xlu0 %155
    %159 = vset.pattern.permute.xlu0 0
    %160 = vperm.xlu0 %159, %v146
    %v161 = vpop.permute.xlu0 %160
    %164 = vset.pattern.permute.xlu0 0
    %165 = vperm.xlu0 %164, %v147
    %v166 = vpop.permute.xlu0 %165
    %169 = vset.pattern.permute.xlu0 0
    %170 = vperm.xlu0 %169, %v148
    %v171 = vpop.permute.xlu0 %170
    %174 = vset.pattern.permute.xlu0 0
    %175 = vperm.xlu0 %174, %v149
    %v176 = vpop.permute.xlu0 %175
    %179 = vset.pattern.permute.xlu0 0
    %180 = vperm.xlu0 %179, %v150
    %v181 = vpop.permute.xlu0 %180
    %184 = vset.pattern.permute.xlu0 0
    %185 = vperm.xlu0 %184, %v151
    %v186 = vpop.permute.xlu0 %185
    %189 = vset.pattern.permute.xlu0 0
    %190 = vperm.xlu0 %189, %v152
    %v191 = vpop.permute.xlu0 %190
    %v201 = vunpack.c.l.b16 %v137
    %v202 = vunpack.c.l.b16 %v138
    %v203 = vunpack.c.l.b16 %v139
    %v204 = vunpack.c.l.b16 %v140
    %v205 = vunpack.c.l.b16 %v141
    %v206 = vunpack.c.l.b16 %v142
    %v207 = vunpack.c.l.b16 %v143
    %v208 = vunpack.c.l.b16 %v144
    %v209 = vpack.c.b16 %v202, %v201
    %v210 = vpack.c.b16 %v204, %v203
    %v211 = vpack.c.b16 %v206, %v205
    %v212 = vpack.c.b16 %v208, %v207
    %vm213 = vcmask 261120
    %v215 = vsel %vm213, %v209, 0
    %v218 = vsel %vm213, %v210, 0
    %v221 = vsel %vm213, %v211, 0
    %v224 = vsel %vm213, %v212, 0
    %226 = vmatprep.subr.bf16.mxu0 0
    %227 = vmatpush1.bf16.msra.mxu0 0
    %228 = vmatprep.subr.bf16.mxu0 0
    %229 = vmatpush1.bf16.msra.mxu0 0
    %230 = vmatprep.subr.bf16.mxu0 0
    %231 = vmatpush1.bf16.msra.mxu0 0
    %232 = vmatprep.subr.bf16.mxu0 0
    %233 = vmatpush1.bf16.msra.mxu0 0
    %234 = vmatprep.subr.bf16.mxu0 0
    %235 = vmatpush1.bf16.msra.mxu0 0
    %236 = vmatprep.subr.bf16.mxu0 0
    %237 = vmatpush1.bf16.msra.mxu0 0
    %238 = vmatprep.subr.bf16.mxu0 0
    %239 = vmatpush1.bf16.msra.mxu0 %v136
    %240 = vmatprep.subr.bf16.mxu0 0
    %241 = vmatpush1.bf16.msra.mxu0 %v135
    %242 = vmatprep.subr.bf16.mxu0 0
    %243 = vmatpush2.bf16.msra.mxu0 0
    %244 = vmatprep.subr.bf16.mxu0 0
    %245 = vmatpush2.bf16.msra.mxu0 0
    %246 = vmatprep.subr.bf16.mxu0 0
    %247 = vmatpush2.bf16.msra.mxu0 0
    %248 = vmatprep.subr.bf16.mxu0 0
    %249 = vmatpush2.bf16.msra.mxu0 0
    %250 = vmatprep.subr.bf16.mxu0 0
    %251 = vmatpush2.bf16.msra.mxu0 0
    %252 = vmatprep.subr.bf16.mxu0 0
    %253 = vmatpush2.bf16.msra.mxu0 0
    %254 = vmatprep.subr.bf16.mxu0 0
    %255 = vmatpush2.bf16.msra.mxu0 0
    %256 = vmatprep.subr.bf16.mxu0 0
    %257 = vmatpush2.bf16.msra.mxu0 0
    %258 = vmatprep.mubr.bf16.mxu0 0
    %259 = vmatmul.mubr.bf16.gmra.mxu0 %v215
    %v260 = vpop.f32.mrf.mxu0
    %v261 = vadd.f32 %v156, %v260
    %v262 = vpop.f32.mrf.mxu0
    %v263 = vpop.f32.mrf.mxu0
    %v264 = vadd.f32 %v161, %v263
    %v265 = vpop.f32.mrf.mxu0
    %266 = vmatprep.mubr.bf16.mxu0 0
    %267 = vmatmul.mubr.bf16.gmra.mxu0 %v218
    %v268 = vpop.f32.mrf.mxu0
    %v269 = vadd.f32 %v166, %v268
    %v270 = vpop.f32.mrf.mxu0
    %v271 = vpop.f32.mrf.mxu0
    %v272 = vadd.f32 %v171, %v271
    %v273 = vpop.f32.mrf.mxu0
    %274 = vmatprep.mubr.bf16.mxu0 0
    %275 = vmatmul.mubr.bf16.gmra.mxu0 %v221
    %v276 = vpop.f32.mrf.mxu0
    %v277 = vadd.f32 %v176, %v276
    %v278 = vpop.f32.mrf.mxu0
    %v279 = vpop.f32.mrf.mxu0
    %v280 = vadd.f32 %v181, %v279
    %v281 = vpop.f32.mrf.mxu0
    %282 = vmatprep.mubr.bf16.mxu0 0
    %283 = vmatmul.mubr.bf16.gmra.mxu0 %v224
    %v284 = vpop.f32.mrf.mxu0
    %v285 = vadd.f32 %v186, %v284
    %v286 = vpop.f32.mrf.mxu0
    %v287 = vpop.f32.mrf.mxu0
    %v288 = vadd.f32 %v191, %v287
    %v289 = vpop.f32.mrf.mxu0
    %290 = vdwg.mxu0
    %v291 = vpack.c.bf16 %v264, %v261
    %v292 = vpack.c.bf16 %v272, %v269
    %v293 = vpack.c.bf16 %v280, %v277
    %v294 = vpack.c.bf16 %v288, %v285
    %v295 = vmax.bf16 %v291, 0
    %v296 = vmax.bf16 %v292, 0
    %v297 = vmax.bf16 %v293, 0
    %v298 = vmax.bf16 %v294, 0
    %v299 = vld [vmem:[%s5] sm:$0xf]
    %v300 = vld [vmem:[%s5 + $0x4] sm:$0xf]
    %v301 = vld [vmem:[%s5 + $0x8] sm:$0xf]
    %v302 = vld [vmem:[%s5 + $0xc] sm:$0xf]
    %v303 = vld [vmem:[%s6] sm:$0xff]
    %v304 = vld [vmem:[%s6 + $0x8] sm:$0xff]
    %v305 = vld [vmem:[%s6 + $0x10] sm:$0xff]
    %v306 = vld [vmem:[%s6 + $0x18] sm:$0xff]
    %308 = vset.pattern.permute.xlu0 0
    %309 = vperm.xlu0 %308, %v303
    %v310 = vpop.permute.xlu0 %309
    %313 = vset.pattern.permute.xlu0 0
    %314 = vperm.xlu0 %313, %v304
    %v315 = vpop.permute.xlu0 %314
    %318 = vset.pattern.permute.xlu0 0
    %319 = vperm.xlu0 %318, %v305
    %v320 = vpop.permute.xlu0 %319
    %323 = vset.pattern.permute.xlu0 0
    %324 = vperm.xlu0 %323, %v306
    %v325 = vpop.permute.xlu0 %324
    %v331 = vunpack.c.l.b16 %v299
    %v332 = vunpack.c.l.b16 %v300
    %v333 = vunpack.c.l.b16 %v301
    %v334 = vunpack.c.l.b16 %v302
    %v335 = vpack.c.b16 %v332, %v331
    %v336 = vpack.c.b16 %v334, %v333
    %vm337 = vcmask 523264
    %v339 = vsel %vm337, %v335, 0
    %v342 = vsel %vm337, %v336, 0
    %344 = vmatprep.subr.bf16.mxu0 0
    %345 = vmatpush1.bf16.msra.mxu0 0
    %346 = vmatprep.subr.bf16.mxu0 0
    %347 = vmatpush1.bf16.msra.mxu0 0
    %348 = vmatprep.subr.bf16.mxu0 0
    %349 = vmatpush1.bf16.msra.mxu0 0
    %350 = vmatprep.subr.bf16.mxu0 0
    %351 = vmatpush1.bf16.msra.mxu0 0
    %352 = vmatprep.subr.bf16.mxu0 0
    %353 = vmatpush1.bf16.msra.mxu0 %v298
    %354 = vmatprep.subr.bf16.mxu0 0
    %355 = vmatpush1.bf16.msra.mxu0 %v297
    %356 = vmatprep.subr.bf16.mxu0 0
    %357 = vmatpush1.bf16.msra.mxu0 %v296
    %358 = vmatprep.subr.bf16.mxu0 0
    %359 = vmatpush1.bf16.msra.mxu0 %v295
    %360 = vmatprep.subr.bf16.mxu0 0
    %361 = vmatpush2.bf16.msra.mxu0 0
    %362 = vmatprep.subr.bf16.mxu0 0
    %363 = vmatpush2.bf16.msra.mxu0 0
    %364 = vmatprep.subr.bf16.mxu0 0
    %365 = vmatpush2.bf16.msra.mxu0 0
    %366 = vmatprep.subr.bf16.mxu0 0
    %367 = vmatpush2.bf16.msra.mxu0 0
    %368 = vmatprep.subr.bf16.mxu0 0
    %369 = vmatpush2.bf16.msra.mxu0 0
    %370 = vmatprep.subr.bf16.mxu0 0
    %371 = vmatpush2.bf16.msra.mxu0 0
    %372 = vmatprep.subr.bf16.mxu0 0
    %373 = vmatpush2.bf16.msra.mxu0 0
    %374 = vmatprep.subr.bf16.mxu0 0
    %375 = vmatpush2.bf16.msra.mxu0 0
    %376 = vmatprep.mubr.bf16.mxu0 0
    %377 = vmatmul.mubr.bf16.gmra.mxu0 %v339
    %v378 = vpop.f32.mrf.mxu0
    %v379 = vadd.f32 %v310, %v378
    %v380 = vpop.f32.mrf.mxu0
    %v381 = vpop.f32.mrf.mxu0
    %v382 = vadd.f32 %v315, %v381
    %v383 = vpop.f32.mrf.mxu0
    %384 = vmatprep.mubr.bf16.mxu0 0
    %385 = vmatmul.mubr.bf16.gmra.mxu0 %v342
    %v386 = vpop.f32.mrf.mxu0
    %v387 = vadd.f32 %v320, %v386
    %v388 = vpop.f32.mrf.mxu0
    %v389 = vpop.f32.mrf.mxu0
    %v390 = vadd.f32 %v325, %v389
    %v391 = vpop.f32.mrf.mxu0
    %392 = vdwg.mxu0
    %v393 = vpack.c.bf16 %v382, %v379
    %v394 = vpack.c.bf16 %v390, %v387
    %v395 = vmax.bf16 %v393, 0
    %v396 = vmax.bf16 %v394, 0
    %v397 = vld [vmem:[%s7] sm:$0x1]
    %v398 = vld [vmem:[%s8] sm:$0x3]
    %400 = vset.pattern.permute.xlu0 0
    %401 = vperm.xlu0 %400, %v398
    %v402 = vpop.permute.xlu0 %401
    %v405 = vsel %vm213, %v397, 0
    %407 = vmatprep.subr.bf16.mxu0 0
    %408 = vmatpush1.bf16.msra.mxu0 0
    %409 = vmatprep.subr.bf16.mxu0 0
    %410 = vmatpush1.bf16.msra.mxu0 0
    %411 = vmatprep.subr.bf16.mxu0 0
    %412 = vmatpush1.bf16.msra.mxu0 0
    %413 = vmatprep.subr.bf16.mxu0 0
    %414 = vmatpush1.bf16.msra.mxu0 0
    %415 = vmatprep.subr.bf16.mxu0 0
    %416 = vmatpush1.bf16.msra.mxu0 0
    %417 = vmatprep.subr.bf16.mxu0 0
    %418 = vmatpush1.bf16.msra.mxu0 0
    %419 = vmatprep.subr.bf16.mxu0 0
    %420 = vmatpush1.bf16.msra.mxu0 %v396
    %421 = vmatprep.subr.bf16.mxu0 0
    %422 = vmatpush1.bf16.msra.mxu0 %v395
    %423 = vmatprep.subr.bf16.mxu0 0
    %424 = vmatpush2.bf16.msra.mxu0 0
    %425 = vmatprep.subr.bf16.mxu0 0
    %426 = vmatpush2.bf16.msra.mxu0 0
    %427 = vmatprep.subr.bf16.mxu0 0
    %428 = vmatpush2.bf16.msra.mxu0 0
    %429 = vmatprep.subr.bf16.mxu0 0
    %430 = vmatpush2.bf16.msra.mxu0 0
    %431 = vmatprep.subr.bf16.mxu0 0
    %432 = vmatpush2.bf16.msra.mxu0 0
    %433 = vmatprep.subr.bf16.mxu0 0
    %434 = vmatpush2.bf16.msra.mxu0 0
    %435 = vmatprep.subr.bf16.mxu0 0
    %436 = vmatpush2.bf16.msra.mxu0 0
    %437 = vmatprep.subr.bf16.mxu0 0
    %438 = vmatpush2.bf16.msra.mxu0 0
    %439 = vmatprep.mubr.bf16.mxu0 0
    %440 = vmatmul.mubr.bf16.gmra.mxu0 %v405
    %v441 = vpop.f32.mrf.mxu0
    %v442 = vadd.f32 %v402, %v441
    %v443 = vpop.f32.mrf.mxu0
    %v444 = vpop.f32.mrf.mxu0
    %v445 = vpop.f32.mrf.mxu0
    %446 = vdwg.mxu0
    %vm447 = vcmask 58368
    %448 = vst.msk [vmem:[#allocation2] sm:$0x3] %vm447, %v442
    // Predicated region
    $region38: #{tpu_custom_call.1} parent=1 // pred_check
      _
    $region39: #{tpu_custom_call.1} parent=1 // pred_check_branch
      %450 = sbr.rel (0) target = $region41
    $region40: #{tpu_custom_call.1} parent=1 // pred_region
      %s452 = ssub.s32 32, 32
      %453 = vsyncadd [#allocation3], %s452
      %s455 = sshll.u32 [#allocation2], 4
      %s456 = int_to_ptr.vmem [resolvable:$true] %s455
      %458 = dma.vmem_to_hbm [thread:$0]  %s456, 32, %s9, [#allocation3]
    $region41: #{tpu_custom_call.1} parent=1 // pred_fallthru
      _
    // Predicated region
    $region42: #{tpu_custom_call.1} parent=1 // pred_check
      _
    $region43: #{tpu_custom_call.1} parent=1 // pred_check_branch
      %460 = sbr.rel (0) target = $region45
    $region44: #{tpu_custom_call.1} parent=1 // pred_region
      %461 = dma.done [#allocation3], 32
    $region45: #{tpu_custom_call.1} parent=1 // pred_fallthru
      _
    %462 = vsyncpa [#allocation3], 1

</llo_original>
